<compile_context>
chip_gen: v7x
topology: tpu7x:2x2x1
jax: 0.10.0
libtpu: 0.0.40
codegen_flags: <defaults>
</compile_context>

<pallas_src>
import functools

import jax
import jax.numpy as jnp
from jax.experimental import pallas as pl
from jax.experimental.pallas import tpu as pltpu


def factor_attention_kernel(x_ref, wt_ref, bw_ref, v_ref, gamma_ref, beta_ref,
                            o_ref, *, true_h, true_s):
    # x_ref block: (Bt, Sp, Hp); params are full, grid-invariant, padded to Hp.
    bt, s, hp = x_ref.shape
    x_in = x_ref[...]
    x3 = x_in.astype(jnp.float32)                               # (Bt, Sp, Hp)

    # ---- u = tanh(x @ W^T + b_W): bf16 MXU operands, f32 accumulate/epilogue.
    #      Sp is a multiple of 8, so the reshape is layout-preserving. ----
    x2 = x_in.reshape(bt * s, hp).astype(jnp.bfloat16)
    u2 = jnp.tanh(
        jnp.dot(x2, wt_ref[...], preferred_element_type=jnp.float32)
        + bw_ref[...]                                           # (1, Hp) broadcast
    )                                                           # (Bt*Sp, Hp) f32
    u3 = u2.reshape(bt, s, hp)

    # ---- scores = u @ V^T: width-1 matmul -> VPU mul + XLU lane reduce.
    #      (b_V is a uniform shift, exactly cancelled by softmax.) ----
    scores = jnp.sum(u3 * v_ref[...], axis=-1, keepdims=True)   # (Bt, Sp, 1)
    if true_s != s:
        # Padded sequence rows must not contaminate the softmax denominator.
        seq = jax.lax.broadcasted_iota(jnp.int32, (1, s, 1), 1)
        scores = jnp.where(seq < true_s, scores, jnp.float32(-1e30))

    # ---- softmax over the sequence axis (dim=1), per batch element ----
    m = jnp.max(scores, axis=1, keepdims=True)                  # (Bt, 1, 1)
    e = jnp.exp(scores - m)                                     # (Bt, Sp, 1)
    attn = e * pl.reciprocal(jnp.sum(e, axis=1, keepdims=True), approx=True)

    # dropout(p=0.1) -> identity (eval mode)

    # ---- z = x + x * attn ; LayerNorm over the (true) hidden axis ----
    z = x3 + x3 * attn                                          # padded lanes stay 0
    inv_h = 1.0 / float(true_h)
    mu = jnp.sum(z, axis=-1, keepdims=True) * inv_h             # pad lanes are exactly 0
    zc = z - mu
    if true_h != hp:
        lane = jax.lax.broadcasted_iota(jnp.int32, (1, 1, hp), 2)
        zc_m = jnp.where(lane < true_h, zc, 0.0)                # mask pad out of variance
    else:
        zc_m = zc
    var = jnp.sum(zc_m * zc_m, axis=-1, keepdims=True) * inv_h
    y = zc * jax.lax.rsqrt(var + 1e-5) * gamma_ref[...] + beta_ref[...]
    o_ref[...] = y.astype(o_ref.dtype)                          # pad lanes: gamma=beta=0 -> 0


def factor_attention_layer(x, w_weight, w_bias, v_weight, v_bias, gamma, beta):
    """x: (B, S, H).  w_weight: (H, H) torch-style (out, in).  v_weight: (1, H).
    Returns (B, S, H) in x.dtype."""
    B, S, H = x.shape
    f32 = jnp.float32

    pad_h = (-H) % 128      # lane-dense stores
    pad_s = (-S) % 8        # layout-preserving (Bt, Sp, Hp) -> (Bt*Sp, Hp) reshape
    Hp, Sp = H + pad_h, S + pad_s

    # Touch the activation in HBM only if padding is actually required, and keep
    # it in the caller's dtype (the kernel upcasts in VMEM).
    if pad_h or pad_s:
        xp = jnp.pad(x, ((0, 0), (0, pad_s), (0, pad_h)))
    else:
        xp = x

    # Parameters are tiny; pad/transpose cost is negligible.  W^T in bf16 for the MXU.
    wt = jnp.pad(jnp.asarray(w_weight, f32).T,
                 ((0, pad_h), (0, pad_h))).astype(jnp.bfloat16)
    bw = jnp.pad(jnp.asarray(w_bias, f32).reshape(1, H), ((0, 0), (0, pad_h)))
    vr = jnp.pad(jnp.asarray(v_weight, f32).reshape(1, H), ((0, 0), (0, pad_h)))
    g = jnp.pad(jnp.asarray(gamma, f32).reshape(1, H), ((0, 0), (0, pad_h)))
    be = jnp.pad(jnp.asarray(beta, f32).reshape(1, H), ((0, 0), (0, pad_h)))
    del v_bias  # uniform pre-softmax shift -> cancels exactly (softmax shift invariance)

    # ---- generation-aware VMEM budget / batch tiling ----
    try:
        vmem_cap = int(pltpu.get_tpu_info().vmem_capacity_bytes)
    except Exception:
        vmem_cap = 64 * 1024 * 1024                 # conservative (v7x per-core VMEM)
    vmem_limit = int(0.75 * vmem_cap)

    x_isz = jnp.dtype(xp.dtype).itemsize
    # Resident VMEM per batch element: in + out blocks (double-buffered) plus
    # ~4 live f32 intermediates (x3, u, z, exp/attn) in the kernel body.
    per_b = Sp * Hp * (2 * x_isz + 2 * x_isz + 4 * 4)
    fixed = 2 * Hp * Hp * 2 + 16 * Hp * 4           # bf16 W^T (double-buffered) + param rows
    budget = int(0.6 * vmem_limit) - fixed          # slack for compiler temps / spills
    max_bt = max(1, budget // per_b)
    if B >= 2:
        max_bt = min(max_bt, pl.cdiv(B, 2))         # grid >= 2 steps: both v7x TCs busy
    bt = max(1, min(max_bt, B))
    if bt * Sp > 256:                               # soft-align the MXU M dimension
        aligned = (bt * Sp // 256) * 256
        if aligned >= Sp and aligned % Sp == 0:
            bt = aligned // Sp
    grid = (pl.cdiv(B, bt),)

    def invariant(shape):
        n = len(shape)
        return pl.BlockSpec(shape, lambda i, _n=n: (0,) * _n)

    kernel = functools.partial(factor_attention_kernel, true_h=H, true_s=S)

    cost = pl.CostEstimate(
        flops=int(2 * B * Sp * Hp * Hp + 8 * B * Sp * Hp),
        transcendentals=int(B * Sp * (Hp + 1)),
        bytes_accessed=int(2 * B * Sp * Hp * x_isz + Hp * Hp * 2 + 5 * Hp * 4),
    )

    out = pl.pallas_call(
        kernel,
        out_shape=jax.ShapeDtypeStruct((B, Sp, Hp), x.dtype),
        grid_spec=pltpu.PrefetchScalarGridSpec(
            num_scalar_prefetch=0,
            grid=grid,
            in_specs=[
                pl.BlockSpec((bt, Sp, Hp), lambda i: (i, 0, 0)),  # x: Bt batches/step
                invariant((Hp, Hp)),                              # W^T (bf16, grid-invariant)
                invariant((1, Hp)),                               # b_W
                invariant((1, Hp)),                               # V row
                invariant((1, Hp)),                               # gamma
                invariant((1, Hp)),                               # beta
            ],
            out_specs=pl.BlockSpec((bt, Sp, Hp), lambda i: (i, 0, 0)),
        ),
        compiler_params=pltpu.CompilerParams(
            dimension_semantics=("parallel",),        # batch axis -> both TCs on v7x
            vmem_limit_bytes=vmem_limit,
        ),
        cost_estimate=cost,
    )(xp, wt, bw, vr, g, be)

    if pad_h or pad_s:
        out = out[:, :S, :H]
    return out


def _reference(x, w_weight, w_bias, v_weight, v_bias, gamma, beta):
    """Pure-JAX reference matching the PyTorch forward (eval mode)."""
    u = jnp.tanh(jnp.einsum("bsh,oh->bso", x, w_weight) + w_bias)
    scores = jnp.einsum("bsh,oh->bso", u, v_weight) + v_bias     # (B, S, 1)
    attn = jax.nn.softmax(scores, axis=1)
    z = x + x * attn
    mu = jnp.mean(z, axis=-1, keepdims=True)
    var = jnp.mean((z - mu) ** 2, axis=-1, keepdims=True)
    return (z - mu) / jnp.sqrt(var + 1e-5) * gamma + beta


if __name__ == "__main__":
    B, S, H = 2, 8, 32
    key = jax.random.PRNGKey(0)
    kx, kw, kbw, kv, kbv = jax.random.split(key, 5)

    x = jax.random.normal(kx, (B, S, H), dtype=jnp.float32)

    # Deterministic parameter init (shapes from the module's __init__).
    w_weight = jax.random.normal(kw, (H, H), dtype=jnp.float32) * 0.1   # Linear(H, H)
    w_bias = jax.random.normal(kbw, (H,), dtype=jnp.float32) * 0.1
    v_weight = jax.random.normal(kv, (1, H), dtype=jnp.float32) * 0.1   # Linear(H, 1)
    v_bias = jax.random.normal(kbv, (1,), dtype=jnp.float32) * 0.1
    gamma = jnp.ones((H,), dtype=jnp.float32)                           # LayerNorm
    beta = jnp.zeros((H,), dtype=jnp.float32)

    out = factor_attention_layer(x, w_weight, w_bias, v_weight, v_bias, gamma, beta)
    out = jax.block_until_ready(out)

    ref = _reference(x, w_weight, w_bias, v_weight, v_bias, gamma, beta)
    assert out.shape == (B, S, H)
    # Tolerance accounts for bf16 MXU operands and the approx (EUP) reciprocal.
    assert jnp.allclose(out, ref, atol=1e-2, rtol=1e-2), \
        f"max err {jnp.max(jnp.abs(out - ref))}"

    print("KERNEL_OK")
</pallas_src>

<mosaic_0001>
module attributes {stable_mosaic.version = 11 : i64} {
  func.func @factor_attention_kernel(%arg0: i32, %arg1: memref<1x8x128xf32, #tpu.memory_space<vmem>>, %arg2: memref<128x128xbf16, #tpu.memory_space<vmem>>, %arg3: memref<1x128xf32, #tpu.memory_space<vmem>>, %arg4: memref<1x128xf32, #tpu.memory_space<vmem>>, %arg5: memref<1x128xf32, #tpu.memory_space<vmem>>, %arg6: memref<1x128xf32, #tpu.memory_space<vmem>>, %arg7: memref<1x8x128xf32, #tpu.memory_space<vmem>>) attributes {dimension_semantics = [#tpu.dimension_semantics<parallel>], iteration_bounds = array<i64: 2>, scalar_prefetch = 0 : i64, scratch_operands = 0 : i64, tpu.core_type = #tpu.core_type<tc>, window_params = [{transform_indices = @transform_0, window_bounds = array<i64: 1, 8, 128>}, {pipeline_mode = #tpu.pipeline_mode<synchronous>, transform_indices = @transform_1, window_bounds = array<i64: 128, 128>}, {pipeline_mode = #tpu.pipeline_mode<synchronous>, transform_indices = @transform_2, window_bounds = array<i64: 1, 128>}, {pipeline_mode = #tpu.pipeline_mode<synchronous>, transform_indices = @transform_3, window_bounds = array<i64: 1, 128>}, {pipeline_mode = #tpu.pipeline_mode<synchronous>, transform_indices = @transform_4, window_bounds = array<i64: 1, 128>}, {pipeline_mode = #tpu.pipeline_mode<synchronous>, transform_indices = @transform_5, window_bounds = array<i64: 1, 128>}, {transform_indices = @transform_6, window_bounds = array<i64: 1, 8, 128>}]} {
    %c0 = arith.constant 0 : index
    %c0_0 = arith.constant 0 : index
    %c0_1 = arith.constant 0 : index
    %0 = vector.load %arg1[%c0, %c0_0, %c0_1] : memref<1x8x128xf32, #tpu.memory_space<vmem>>, vector<1x8x128xf32>
    %1 = vector.shape_cast %0 : vector<1x8x128xf32> to vector<8x128xf32>
    %2 = arith.truncf %1 : vector<8x128xf32> to vector<8x128xbf16>
    %c0_2 = arith.constant 0 : index
    %c0_3 = arith.constant 0 : index
    %3 = vector.load %arg2[%c0_2, %c0_3] : memref<128x128xbf16, #tpu.memory_space<vmem>>, vector<128x128xbf16>
    %cst = arith.constant dense<0.000000e+00> : vector<8x128xf32>
    %4 = tpu.matmul %2, %3, %cst {dimension_numbers = #tpu.dot_dimension_numbers<[1], [0], [0], [1], [0, 0, 1, 1], [], []>} : vector<8x128xbf16>, vector<128x128xbf16>, vector<8x128xf32> -> vector<8x128xf32>
    %c0_4 = arith.constant 0 : index
    %c0_5 = arith.constant 0 : index
    %5 = vector.load %arg3[%c0_4, %c0_5] : memref<1x128xf32, #tpu.memory_space<vmem>>, vector<1x128xf32>
    %6 = vector.broadcast %5 : vector<1x128xf32> to vector<8x128xf32>
    %7 = arith.addf %4, %6 : vector<8x128xf32>
    %8 = math.tanh %7 : vector<8x128xf32>
    %9 = vector.shape_cast %8 : vector<8x128xf32> to vector<1x8x128xf32>
    %c0_6 = arith.constant 0 : index
    %c0_7 = arith.constant 0 : index
    %10 = vector.load %arg4[%c0_6, %c0_7] : memref<1x128xf32, #tpu.memory_space<vmem>>, vector<1x128xf32>
    %11 = vector.shape_cast %10 : vector<1x128xf32> to vector<1x1x128xf32>
    %12 = vector.broadcast %11 : vector<1x1x128xf32> to vector<1x8x128xf32>
    %13 = arith.mulf %9, %12 : vector<1x8x128xf32>
    %cst_8 = arith.constant dense<0.000000e+00> : vector<1x8xf32>
    %14 = vector.multi_reduction <add>, %13, %cst_8 [2] : vector<1x8x128xf32> to vector<1x8xf32>
    %15 = vector.shape_cast %14 : vector<1x8xf32> to vector<1x8x1xf32>
    %cst_9 = arith.constant dense<0xFF800000> : vector<1x1xf32>
    %16 = vector.multi_reduction <maximumf>, %15, %cst_9 [1] : vector<1x8x1xf32> to vector<1x1xf32>
    %17 = vector.shape_cast %16 : vector<1x1xf32> to vector<1x1x1xf32>
    %18 = vector.broadcast %17 : vector<1x1x1xf32> to vector<1x8x1xf32>
    %19 = arith.subf %15, %18 : vector<1x8x1xf32>
    %20 = math.exp %19 : vector<1x8x1xf32>
    %cst_10 = arith.constant dense<0.000000e+00> : vector<1x1xf32>
    %21 = vector.multi_reduction <add>, %20, %cst_10 [1] : vector<1x8x1xf32> to vector<1x1xf32>
    %22 = vector.shape_cast %21 : vector<1x1xf32> to vector<1x1x1xf32>
    %23 = tpu.reciprocal %22 {approx = true} : vector<1x1x1xf32> -> vector<1x1x1xf32>
    %24 = vector.broadcast %23 : vector<1x1x1xf32> to vector<1x8x1xf32>
    %25 = arith.mulf %20, %24 : vector<1x8x1xf32>
    %26 = vector.broadcast %25 : vector<1x8x1xf32> to vector<1x8x128xf32>
    %27 = arith.mulf %0, %26 : vector<1x8x128xf32>
    %28 = arith.addf %0, %27 : vector<1x8x128xf32>
    %cst_11 = arith.constant dense<0.000000e+00> : vector<1x8xf32>
    %29 = vector.multi_reduction <add>, %28, %cst_11 [2] : vector<1x8x128xf32> to vector<1x8xf32>
    %30 = vector.shape_cast %29 : vector<1x8xf32> to vector<1x8x1xf32>
    %cst_12 = arith.constant 3.125000e-02 : f32
    %31 = vector.broadcast %cst_12 : f32 to vector<1x8x1xf32>
    %32 = arith.mulf %30, %31 : vector<1x8x1xf32>
    %33 = vector.broadcast %32 : vector<1x8x1xf32> to vector<1x8x128xf32>
    %34 = arith.subf %28, %33 : vector<1x8x128xf32>
    %35 = tpu.iota {dimensions = array<i32: 2>} : vector<1x1x128xi32>
    %c32_i32 = arith.constant 32 : i32
    %36 = vector.broadcast %c32_i32 : i32 to vector<1x1x128xi32>
    %37 = arith.cmpi slt, %35, %36 : vector<1x1x128xi32>
    %cst_13 = arith.constant 0.000000e+00 : f32
    %38 = vector.shape_cast %37 : vector<1x1x128xi1> to vector<1x1x128xi1>
    %39 = vector.broadcast %38 : vector<1x1x128xi1> to vector<1x8x128xi1>
    %40 = vector.broadcast %cst_13 : f32 to vector<1x8x128xf32>
    %41 = arith.select %39, %34, %40 : vector<1x8x128xi1>, vector<1x8x128xf32>
    %42 = arith.mulf %41, %41 : vector<1x8x128xf32>
    %cst_14 = arith.constant dense<0.000000e+00> : vector<1x8xf32>
    %43 = vector.multi_reduction <add>, %42, %cst_14 [2] : vector<1x8x128xf32> to vector<1x8xf32>
    %44 = vector.shape_cast %43 : vector<1x8xf32> to vector<1x8x1xf32>
    %cst_15 = arith.constant 3.125000e-02 : f32
    %45 = vector.broadcast %cst_15 : f32 to vector<1x8x1xf32>
    %46 = arith.mulf %44, %45 : vector<1x8x1xf32>
    %cst_16 = arith.constant 9.99999974E-6 : f32
    %47 = vector.broadcast %cst_16 : f32 to vector<1x8x1xf32>
    %48 = arith.addf %46, %47 : vector<1x8x1xf32>
    %49 = math.rsqrt %48 : vector<1x8x1xf32>
    %50 = vector.broadcast %49 : vector<1x8x1xf32> to vector<1x8x128xf32>
    %51 = arith.mulf %34, %50 : vector<1x8x128xf32>
    %c0_17 = arith.constant 0 : index
    %c0_18 = arith.constant 0 : index
    %52 = vector.load %arg5[%c0_17, %c0_18] : memref<1x128xf32, #tpu.memory_space<vmem>>, vector<1x128xf32>
    %53 = vector.shape_cast %52 : vector<1x128xf32> to vector<1x1x128xf32>
    %54 = vector.broadcast %53 : vector<1x1x128xf32> to vector<1x8x128xf32>
    %55 = arith.mulf %51, %54 : vector<1x8x128xf32>
    %c0_19 = arith.constant 0 : index
    %c0_20 = arith.constant 0 : index
    %56 = vector.load %arg6[%c0_19, %c0_20] : memref<1x128xf32, #tpu.memory_space<vmem>>, vector<1x128xf32>
    %57 = vector.shape_cast %56 : vector<1x128xf32> to vector<1x1x128xf32>
    %58 = vector.broadcast %57 : vector<1x1x128xf32> to vector<1x8x128xf32>
    %59 = arith.addf %55, %58 : vector<1x8x128xf32>
    %c0_21 = arith.constant 0 : index
    %c0_22 = arith.constant 0 : index
    %c0_23 = arith.constant 0 : index
    %60 = vector.load %arg7[%c0_21, %c0_22, %c0_23] : memref<1x8x128xf32, #tpu.memory_space<vmem>>, vector<1x8x128xf32>
    tpu.vector_store %arg7[%c0_21, %c0_22, %c0_23], %59 {strides = array<i32>} : memref<1x8x128xf32, #tpu.memory_space<vmem>>, vector<1x8x128xf32>,
    return
  }
  func.func @transform_0(%arg0: i32) -> (i32, i32, i32) {
    %c0_i32 = arith.constant 0 : i32
    %c0_i32_0 = arith.constant 0 : i32
    %c0_i32_1 = arith.constant 0 : i32
    return %arg0, %c0_i32, %c0_i32_0 : i32, i32, i32
  }
  func.func @transform_1(%arg0: i32) -> (i32, i32) {
    %c0_i32 = arith.constant 0 : i32
    %c0_i32_0 = arith.constant 0 : i32
    %c0_i32_1 = arith.constant 0 : i32
    return %c0_i32, %c0_i32_0 : i32, i32
  }
  func.func @transform_2(%arg0: i32) -> (i32, i32) {
    %c0_i32 = arith.constant 0 : i32
    %c0_i32_0 = arith.constant 0 : i32
    %c0_i32_1 = arith.constant 0 : i32
    return %c0_i32, %c0_i32_0 : i32, i32
  }
  func.func @transform_3(%arg0: i32) -> (i32, i32) {
    %c0_i32 = arith.constant 0 : i32
    %c0_i32_0 = arith.constant 0 : i32
    %c0_i32_1 = arith.constant 0 : i32
    return %c0_i32, %c0_i32_0 : i32, i32
  }
  func.func @transform_4(%arg0: i32) -> (i32, i32) {
    %c0_i32 = arith.constant 0 : i32
    %c0_i32_0 = arith.constant 0 : i32
    %c0_i32_1 = arith.constant 0 : i32
    return %c0_i32, %c0_i32_0 : i32, i32
  }
  func.func @transform_5(%arg0: i32) -> (i32, i32) {
    %c0_i32 = arith.constant 0 : i32
    %c0_i32_0 = arith.constant 0 : i32
    %c0_i32_1 = arith.constant 0 : i32
    return %c0_i32, %c0_i32_0 : i32, i32
  }
  func.func @transform_6(%arg0: i32) -> (i32, i32, i32) {
    %c0_i32 = arith.constant 0 : i32
    %c0_i32_0 = arith.constant 0 : i32
    %c0_i32_1 = arith.constant 0 : i32
    return %arg0, %c0_i32, %c0_i32_0 : i32, i32, i32
  }
}

</mosaic_0001>

<llo_original>
// kernel: tpu_custom_call.1
$region0: #{tpu_custom_call.1}
  #allocation0 [shape = 'u32[]', space=smem, size = 0x4, offset = 0x4, fixed_abs, tag = 'smem constant byte address 0x4 - core index']
  #allocation1 [shape = 'u32[144,128]{1,0:T(1,128)}', space=vmem, size = 0x12000, scoped, tag = 'internal scratch']
  %s0 = inlined_call_operand.hbm [shape: f32[2,8,128], index: 0, kind: input, shape index: {}]
  %s1 = inlined_call_operand.hbm [shape: bf16[128,128], index: 1, kind: input, shape index: {}]
  %s2 = inlined_call_operand.vmem [shape: f32[1,128], index: 2, kind: input, shape index: {}]
  %s3 = inlined_call_operand.vmem [shape: f32[1,128], index: 3, kind: input, shape index: {}]
  %s4 = inlined_call_operand.vmem [shape: f32[1,128], index: 4, kind: input, shape index: {}]
  %s5 = inlined_call_operand.vmem [shape: f32[1,128], index: 5, kind: input, shape index: {}]
  %s6 = inlined_call_operand.hbm [shape: f32[2,8,128], index: 6, kind: output, shape index: {}]
  %s7 = sld [smem:[#allocation0]]
  $region65: #{tpu_custom_call.1} parent=0
    _
  %s9 = ssub.s32 1, %s7
  %s10 = scalar_select 0, %s9, %s7
  $region1: #{tpu_custom_call.1} parent=0
    #allocation2 [shape = 'u8[8192]{0}', space=vmem, size = 0x2000, scoped, tag = 'input window, operand 0']
    #allocation3 [shape = 's32[2]{0}', space=sflag, size = 0x8, scoped, tag = 'scoped memory for tpu_custom_call.1']
    #allocation4 [shape = 's32[2]{0}', space=sflag, size = 0x8, scoped, tag = 'scoped memory for tpu_custom_call.1']
    #allocation5 [shape = 'u8[32768]{0}', space=vmem, size = 0x8000, scoped, tag = 'input window, operand 1, single buffered']
    #allocation6 [shape = 's32[1]{0}', space=sflag, size = 0x4, scoped, tag = 'scoped memory for tpu_custom_call.1']
    #allocation7 [shape = 'u8[8192]{0}', space=vmem, size = 0x2000, scoped, tag = 'output window, operand 0']
    %11 = vsyncpa [#allocation3], 0
    %s12 = scalar_lea.sflag [#allocation3], 1
    %13 = vsyncpa %s12, 0
    %14 = vsyncpa [#allocation6], 0
    %15 = vsyncpa [#allocation4], 0
    %s16 = scalar_lea.sflag [#allocation4], 1
    %17 = vsyncpa %s16, 0
    loop: start=0, step=1, limit=4
    $region2: #{tpu_custom_call.1} parent=1 // loop_pre_header
      _
    $region3: #{tpu_custom_call.1} parent=1 // loop_header
      %s19 = sphi 0, %s23
      %p20 = scmp.ge.s32.totalorder %s19, 4
      %s29 = sphi 0, %s31
      %s32 = sphi 0, %s29
      %s33 = sphi 0, %s32
      %s49 = sphi 0, %s33
      %s53 = sphi 0, %s53
      %s55 = sphi 0, %s53
      %s56 = sphi 0, %s55
      %s70 = sphi 0, %s56
      %s74 = sphi 0, %s74
      %s76 = sphi 0, %s74
      %s77 = sphi 0, %s76
      %s91 = sphi 0, %s77
      %s95 = sphi 0, %s95
      %s97 = sphi 0, %s95
      %s98 = sphi 0, %s97
      %s112 = sphi 0, %s98
      %s116 = sphi 0, %s116
      %s118 = sphi 0, %s116
      %s119 = sphi 0, %s118
      %s133 = sphi 0, %s119
      %s137 = sphi 0, %s137
      %s139 = sphi 0, %s137
      %s140 = sphi 0, %s139
      %s154 = sphi 0, %s140
      %s160 = sphi 0, %s162
      %s163 = sphi 0, %s160
      %s164 = sphi 0, %s163
      %s180 = sphi 0, %s164
    $region4: #{tpu_custom_call.1} parent=1 // loop_header_branch
      %22 = sbr.rel (%p20) target = $region8
    $region5: #{tpu_custom_call.1} parent=1 // loop_body
      %s24 = ssub.s32 %s19, 1
      %s25 = ssub.s32 %s19, 2
      %s26 = sadd.s32 %s19, 1
      %s27 = ssub.s32 %s19, %s26
      %p28 = scmp.eq.s32.totalorder %s27, 0
      %s30 = sadd.s32 %s29, 1
      %s31 = scalar_select %p28, %s29, %s30
      %p34 = pneg %p28
      %p35 = scmp.eq.s32.totalorder %s19, 1
      %p36 = por %p34, %p35
      %p37 = scmp.ne.s32.totalorder %s29, %s32
      %p38 = scmp.eq.s32.totalorder %s19, 0
      %p39 = por %p37, %p38
      %p40 = scmp.ne.s32.totalorder %s29, %s32
      %p41 = scmp.eq.s32.totalorder %s24, 1
      %p42 = por %p40, %p41
      %p43 = scmp.ne.s32.totalorder %s32, %s33
      %p44 = scmp.eq.s32.totalorder %s24, 0
      %p45 = por %p43, %p44
      %p46 = scmp.ne.s32.totalorder %s32, %s33
      %p47 = scmp.eq.s32.totalorder %s25, 1
      %p48 = por %p46, %p47
      %p50 = scmp.ne.s32.totalorder %s33, %s49
      %p51 = scmp.eq.s32.totalorder %s25, 0
      %p52 = por %p50, %p51
      %s54 = sadd.s32 %s53, 1
      %p57 = scmp.eq.s32.totalorder %s19, 1
      %p58 = scmp.ne.s32.totalorder %s53, %s55
      %p59 = scmp.eq.s32.totalorder %s19, 0
      %p60 = por %p58, %p59
      %p61 = scmp.ne.s32.totalorder %s53, %s55
      %p62 = scmp.eq.s32.totalorder %s24, 1
      %p63 = por %p61, %p62
      %p64 = scmp.ne.s32.totalorder %s55, %s56
      %p65 = scmp.eq.s32.totalorder %s24, 0
      %p66 = por %p64, %p65
      %p67 = scmp.ne.s32.totalorder %s55, %s56
      %p68 = scmp.eq.s32.totalorder %s25, 1
      %p69 = por %p67, %p68
      %p71 = scmp.ne.s32.totalorder %s56, %s70
      %p72 = scmp.eq.s32.totalorder %s25, 0
      %p73 = por %p71, %p72
      %s75 = sadd.s32 %s74, 1
      %p78 = scmp.eq.s32.totalorder %s19, 1
      %p79 = scmp.ne.s32.totalorder %s74, %s76
      %p80 = scmp.eq.s32.totalorder %s19, 0
      %p81 = por %p79, %p80
      %p82 = scmp.ne.s32.totalorder %s74, %s76
      %p83 = scmp.eq.s32.totalorder %s24, 1
      %p84 = por %p82, %p83
      %p85 = scmp.ne.s32.totalorder %s76, %s77
      %p86 = scmp.eq.s32.totalorder %s24, 0
      %p87 = por %p85, %p86
      %p88 = scmp.ne.s32.totalorder %s76, %s77
      %p89 = scmp.eq.s32.totalorder %s25, 1
      %p90 = por %p88, %p89
      %p92 = scmp.ne.s32.totalorder %s77, %s91
      %p93 = scmp.eq.s32.totalorder %s25, 0
      %p94 = por %p92, %p93
      %s96 = sadd.s32 %s95, 1
      %p99 = scmp.eq.s32.totalorder %s19, 1
      %p100 = scmp.ne.s32.totalorder %s95, %s97
      %p101 = scmp.eq.s32.totalorder %s19, 0
      %p102 = por %p100, %p101
      %p103 = scmp.ne.s32.totalorder %s95, %s97
      %p104 = scmp.eq.s32.totalorder %s24, 1
      %p105 = por %p103, %p104
      %p106 = scmp.ne.s32.totalorder %s97, %s98
      %p107 = scmp.eq.s32.totalorder %s24, 0
      %p108 = por %p106, %p107
      %p109 = scmp.ne.s32.totalorder %s97, %s98
      %p110 = scmp.eq.s32.totalorder %s25, 1
      %p111 = por %p109, %p110
      %p113 = scmp.ne.s32.totalorder %s98, %s112
      %p114 = scmp.eq.s32.totalorder %s25, 0
      %p115 = por %p113, %p114
      %s117 = sadd.s32 %s116, 1
      %p120 = scmp.eq.s32.totalorder %s19, 1
      %p121 = scmp.ne.s32.totalorder %s116, %s118
      %p122 = scmp.eq.s32.totalorder %s19, 0
      %p123 = por %p121, %p122
      %p124 = scmp.ne.s32.totalorder %s116, %s118
      %p125 = scmp.eq.s32.totalorder %s24, 1
      %p126 = por %p124, %p125
      %p127 = scmp.ne.s32.totalorder %s118, %s119
      %p128 = scmp.eq.s32.totalorder %s24, 0
      %p129 = por %p127, %p128
      %p130 = scmp.ne.s32.totalorder %s118, %s119
      %p131 = scmp.eq.s32.totalorder %s25, 1
      %p132 = por %p130, %p131
      %p134 = scmp.ne.s32.totalorder %s119, %s133
      %p135 = scmp.eq.s32.totalorder %s25, 0
      %p136 = por %p134, %p135
      %s138 = sadd.s32 %s137, 1
      %p141 = scmp.eq.s32.totalorder %s19, 1
      %p142 = scmp.ne.s32.totalorder %s137, %s139
      %p143 = scmp.eq.s32.totalorder %s19, 0
      %p144 = por %p142, %p143
      %p145 = scmp.ne.s32.totalorder %s137, %s139
      %p146 = scmp.eq.s32.totalorder %s24, 1
      %p147 = por %p145, %p146
      %p148 = scmp.ne.s32.totalorder %s139, %s140
      %p149 = scmp.eq.s32.totalorder %s24, 0
      %p150 = por %p148, %p149
      %p151 = scmp.ne.s32.totalorder %s139, %s140
      %p152 = scmp.eq.s32.totalorder %s25, 1
      %p153 = por %p151, %p152
      %p155 = scmp.ne.s32.totalorder %s140, %s154
      %p156 = scmp.eq.s32.totalorder %s25, 0
      %p157 = por %p155, %p156
      %s158 = ssub.s32 %s19, %s26
      %p159 = scmp.eq.s32.totalorder %s158, 0
      %s161 = sadd.s32 %s160, 1
      %s162 = scalar_select %p159, %s160, %s161
      %p165 = pneg %p159
      %p166 = scmp.eq.s32.totalorder %s19, 1
      %p167 = por %p165, %p166
      %p168 = scmp.ne.s32.totalorder %s160, %s163
      %p169 = scmp.eq.s32.totalorder %s19, 0
      %p170 = por %p168, %p169
      %p171 = scmp.ne.s32.totalorder %s160, %s163
      %p172 = scmp.eq.s32.totalorder %s24, 1
      %p173 = por %p171, %p172
      %p174 = scmp.ne.s32.totalorder %s163, %s164
      %p175 = scmp.eq.s32.totalorder %s24, 0
      %p176 = por %p174, %p175
      %p177 = scmp.ne.s32.totalorder %s163, %s164
      %p178 = scmp.eq.s32.totalorder %s25, 1
      %p179 = por %p177, %p178
      %p181 = scmp.ne.s32.totalorder %s164, %s180
      %p182 = scmp.eq.s32.totalorder %s25, 0
      %p183 = por %p181, %p182
      %p184 = scmp.le.s32.totalorder 1, %s19
      %p185 = scmp.lt.s32.totalorder %s19, 3
      %p186 = pnand %p184, %p185
      %p187 = pneg %p186
      // Predicated region
      $region9: #{tpu_custom_call.1} parent=5 // pred_check
        _
      $region10: #{tpu_custom_call.1} parent=5 // pred_check_branch
        %189 = sbr.rel (%p186) target = $region12
      $region11: #{tpu_custom_call.1} parent=5 // pred_region
        %s190 = ssub.s32 %s19, 1
        // Predicated region
        $region13: #{tpu_custom_call.1} parent=11 // pred_check
          %p191 = pneg %p66
        $region14: #{tpu_custom_call.1} parent=11 // pred_check_branch
          %193 = sbr.rel (%p191) target = $region16
        $region15: #{tpu_custom_call.1} parent=11 // pred_region
          %s195 = ssub.s32 1024, 1024
          %196 = vsyncadd [#allocation6], %s195
          %s197 = sshll.u32 [#allocation5], 4
          %s198 = int_to_ptr.vmem [resolvable:$true] %s197
          %203 = dma.hbm_to_vmem [thread:$0]  %s1, 1024, %s198, [#allocation6], 64, 64, 4
        $region16: #{tpu_custom_call.1} parent=11 // pred_fallthru
          _
        // Predicated region
        $region17: #{tpu_custom_call.1} parent=11 // pred_check
          %p204 = pneg %p87
        $region18: #{tpu_custom_call.1} parent=11 // pred_check_branch
          %206 = sbr.rel (%p204) target = $region20
        $region19: #{tpu_custom_call.1} parent=11 // pred_region
          _
        $region20: #{tpu_custom_call.1} parent=11 // pred_fallthru
          _
        // Predicated region
        $region21: #{tpu_custom_call.1} parent=11 // pred_check
          %p207 = pneg %p108
        $region22: #{tpu_custom_call.1} parent=11 // pred_check_branch
          %209 = sbr.rel (%p207) target = $region24
        $region23: #{tpu_custom_call.1} parent=11 // pred_region
          _
        $region24: #{tpu_custom_call.1} parent=11 // pred_fallthru
          _
        // Predicated region
        $region25: #{tpu_custom_call.1} parent=11 // pred_check
          %p210 = pneg %p129
        $region26: #{tpu_custom_call.1} parent=11 // pred_check_branch
          %212 = sbr.rel (%p210) target = $region28
        $region27: #{tpu_custom_call.1} parent=11 // pred_region
          _
        $region28: #{tpu_custom_call.1} parent=11 // pred_fallthru
          _
        // Predicated region
        $region29: #{tpu_custom_call.1} parent=11 // pred_check
          %p213 = pneg %p150
        $region30: #{tpu_custom_call.1} parent=11 // pred_check_branch
          %215 = sbr.rel (%p213) target = $region32
        $region31: #{tpu_custom_call.1} parent=11 // pred_region
          _
        $region32: #{tpu_custom_call.1} parent=11 // pred_fallthru
          _
      $region12: #{tpu_custom_call.1} parent=5 // pred_fallthru
        _
      %p216 = scmp.lt.s32.totalorder %s19, 2
      // Predicated region
      $region33: #{tpu_custom_call.1} parent=5 // pred_check
        %p217 = pneg %p216
      $region34: #{tpu_custom_call.1} parent=5 // pred_check_branch
        %219 = sbr.rel (%p217) target = $region36
      $region35: #{tpu_custom_call.1} parent=5 // pred_region
        // Predicated region
        $region37: #{tpu_custom_call.1} parent=35 // pred_check
          %p220 = pneg %p39
        $region38: #{tpu_custom_call.1} parent=35 // pred_check_branch
          %222 = sbr.rel (%p220) target = $region40
        $region39: #{tpu_custom_call.1} parent=35 // pred_region
          %s223 = sand.u32 %s29, 1
          %s224 = scalar_lea.sflag [#allocation3], %s223
          %s225 = sand.u32 %s29, 1
          %s226 = smul.addr %s225, 8
          %s227 = scalar_lea.vmem [#allocation2], %s226
          %s229 = ssub.s32 128, 128
          %230 = vsyncadd %s224, %s229
          %s231 = smul.addr %s19, 128
          %s232 = scalar_lea.hbm %s0, %s231
          %s234 = sshll.u32 %s227, 4
          %s235 = int_to_ptr.vmem [resolvable:$true] %s234
          %237 = dma.hbm_to_vmem [thread:$0]  %s232, 128, %s235, %s224
        $region40: #{tpu_custom_call.1} parent=35 // pred_fallthru
          _
      $region36: #{tpu_custom_call.1} parent=5 // pred_fallthru
        _
      %p238 = scmp.le.s32.totalorder 1, %s19
      %p239 = scmp.lt.s32.totalorder %s19, 3
      %p240 = pnand %p238, %p239
      %p241 = pneg %p240
      // Predicated region
      $region41: #{tpu_custom_call.1} parent=5 // pred_check
        _
      $region42: #{tpu_custom_call.1} parent=5 // pred_check_branch
        %243 = sbr.rel (%p240) target = $region44
      $region43: #{tpu_custom_call.1} parent=5 // pred_region
        %s244 = ssub.s32 %s19, 1
        %s245 = sand.u32 %s32, 1
        %s246 = scalar_lea.sflag [#allocation3], %s245
        %s247 = sand.u32 %s32, 1
        %s248 = smul.addr %s247, 8
        %s249 = scalar_lea.vmem [#allocation2], %s248
        // Predicated region
        $region45: #{tpu_custom_call.1} parent=43 // pred_check
          %p250 = pneg %p45
        $region46: #{tpu_custom_call.1} parent=43 // pred_check_branch
          %252 = sbr.rel (%p250) target = $region48
        $region47: #{tpu_custom_call.1} parent=43 // pred_region
          %253 = dma.done %s246, 128
        $region48: #{tpu_custom_call.1} parent=43 // pred_fallthru
          _
        // Predicated region
        $region49: #{tpu_custom_call.1} parent=43 // pred_check
          %p254 = pneg %p66
        $region50: #{tpu_custom_call.1} parent=43 // pred_check_branch
          %256 = sbr.rel (%p254) target = $region52
        $region51: #{tpu_custom_call.1} parent=43 // pred_region
          %257 = dma.done [#allocation6], 1024
        $region52: #{tpu_custom_call.1} parent=43 // pred_fallthru
          _
        %s258 = sand.u32 %s32, 1
        %s259 = scalar_lea.sflag [#allocation3], %s258
        %s260 = sand.u32 %s32, 1
        %s261 = smul.addr %s260, 8
        %s262 = scalar_lea.vmem [#allocation2], %s261
        %p263 = pneg %p45
        %p264 = pneg %p42
        %p265 = pneg %p66
        %p266 = pneg %p63
        %p267 = pneg %p87
        %p268 = pneg %p84
        %p269 = pneg %p108
        %p270 = pneg %p105
        %p271 = pneg %p129
        %p272 = pneg %p126
        %p273 = pneg %p150
        %p274 = pneg %p147
        %p275 = pneg %p176
        %p276 = pneg %p173
        %s277 = sand.u32 %s163, 1
        %s278 = scalar_lea.sflag [#allocation4], %s277
        %s279 = sand.u32 %s163, 1
        %s280 = smul.addr %s279, 8
        %s281 = scalar_lea.vmem [#allocation7], %s280
        %v283 = vld [vmem:[%s249] sm:$0xff]
        %v284 = vpack.c.bf16 %v283, %v283
        %v285 = vld [vmem:[#allocation5] sm:$0xf]
        %v286 = vld [vmem:[#allocation5 + $0x4] sm:$0xf]
        %v287 = vld [vmem:[#allocation5 + $0x8] sm:$0xf]
        %v288 = vld [vmem:[#allocation5 + $0xc] sm:$0xf]
        %v289 = vld [vmem:[#allocation5 + $0x10] sm:$0xf]
        %v290 = vld [vmem:[#allocation5 + $0x14] sm:$0xf]
        %v291 = vld [vmem:[#allocation5 + $0x18] sm:$0xf]
        %v292 = vld [vmem:[#allocation5 + $0x1c] sm:$0xf]
        %v293 = vld [vmem:[#allocation5 + $0x20] sm:$0xf]
        %v294 = vld [vmem:[#allocation5 + $0x24] sm:$0xf]
        %v295 = vld [vmem:[#allocation5 + $0x28] sm:$0xf]
        %v296 = vld [vmem:[#allocation5 + $0x2c] sm:$0xf]
        %v297 = vld [vmem:[#allocation5 + $0x30] sm:$0xf]
        %v298 = vld [vmem:[#allocation5 + $0x34] sm:$0xf]
        %v299 = vld [vmem:[#allocation5 + $0x38] sm:$0xf]
        %v300 = vld [vmem:[#allocation5 + $0x3c] sm:$0xf]
        %v301 = vld [vmem:[%s2] sm:$0x1]
        %v303 = vlaneseq
        %v304 = vshrl.u32 %v303, 7
        %v305 = vsub.s32 0, %v304
        %v306 = vrot.slane %v301, %v305
        %v324 = vunpack.c.l.b16 %v285
        %v325 = vunpack.c.l.b16 %v286
        %v326 = vunpack.c.l.b16 %v287
        %v327 = vunpack.c.l.b16 %v288
        %v328 = vunpack.c.l.b16 %v289
        %v329 = vunpack.c.l.b16 %v290
        %v330 = vunpack.c.l.b16 %v291
        %v331 = vunpack.c.l.b16 %v292
        %v332 = vunpack.c.l.b16 %v293
        %v333 = vunpack.c.l.b16 %v294
        %v334 = vunpack.c.l.b16 %v295
        %v335 = vunpack.c.l.b16 %v296
        %v336 = vunpack.c.l.b16 %v297
        %v337 = vunpack.c.l.b16 %v298
        %v338 = vunpack.c.l.b16 %v299
        %v339 = vunpack.c.l.b16 %v300
        %v340 = vpack.c.b16 %v325, %v324
        %v341 = vpack.c.b16 %v327, %v326
        %v342 = vpack.c.b16 %v329, %v328
        %v343 = vpack.c.b16 %v331, %v330
        %v344 = vpack.c.b16 %v333, %v332
        %v345 = vpack.c.b16 %v335, %v334
        %v346 = vpack.c.b16 %v337, %v336
        %v347 = vpack.c.b16 %v339, %v338
        %356 = vmatprep.subr.bf16.mxu0 0
        %357 = vmatpush1.bf16.msra.mxu0 %v340
        %358 = vmatprep.subr.bf16.mxu0 0
        %359 = vmatpush1.bf16.msra.mxu0 %v341
        %360 = vmatprep.subr.bf16.mxu0 0
        %361 = vmatpush1.bf16.msra.mxu0 %v342
        %362 = vmatprep.subr.bf16.mxu0 0
        %363 = vmatpush1.bf16.msra.mxu0 %v343
        %364 = vmatprep.subr.bf16.mxu0 0
        %365 = vmatpush1.bf16.msra.mxu0 %v344
        %366 = vmatprep.subr.bf16.mxu0 0
        %367 = vmatpush1.bf16.msra.mxu0 %v345
        %368 = vmatprep.subr.bf16.mxu0 0
        %369 = vmatpush1.bf16.msra.mxu0 %v346
        %370 = vmatprep.subr.bf16.mxu0 0
        %371 = vmatpush1.bf16.msra.mxu0 %v347
        %372 = vmatprep.subr.bf16.mxu0 0
        %373 = vmatpush1.bf16.msra.mxu0 0
        %374 = vmatprep.subr.bf16.mxu0 0
        %375 = vmatpush1.bf16.msra.mxu0 0
        %376 = vmatprep.subr.bf16.mxu0 0
        %377 = vmatpush1.bf16.msra.mxu0 0
        %378 = vmatprep.subr.bf16.mxu0 0
        %379 = vmatpush1.bf16.msra.mxu0 0
        %380 = vmatprep.subr.bf16.mxu0 0
        %381 = vmatpush1.bf16.msra.mxu0 0
        %382 = vmatprep.subr.bf16.mxu0 0
        %383 = vmatpush1.bf16.msra.mxu0 0
        %384 = vmatprep.subr.bf16.mxu0 0
        %385 = vmatpush1.bf16.msra.mxu0 0
        %386 = vmatprep.subr.bf16.mxu0 0
        %387 = vmatpush1.bf16.msra.mxu0 0
        %388 = vmatprep.mubr.bf16.mxu0 0
        %389 = vmatmul.mubr.bf16.gmra.mrb[0].mxu0 %v284
        %v390 = vpop.f32.mrb[0].mxu0
        %v391 = vadd.f32 %v306, %v390
        %v392 = vpop.f32.mrb[0].mxu0
        %v393 = vpop.f32.mrb[0].mxu0
        %v394 = vpop.f32.mrb[0].mxu0
        %395 = vdwg.mxu0
        %v396 = vtanh.pop %v391
        %v397 = vld [vmem:[%s3] sm:$0x1]
        %v399 = vlaneseq
        %v400 = vshrl.u32 %v399, 7
        %v401 = vsub.s32 0, %v400
        %v402 = vrot.slane %v397, %v401
        %v404 = vmul.f32 %v396, %v402
        %405 = vadd.xlane.f32.xlu0 %v404
        %v406 = vpop.xlane.xlu0 %405
        %v407 = vrot.slane %v406, 4
        %v408 = vmax.f32 %v406, %v407
        %v409 = vrot.slane %v408, 2
        %v410 = vmax.f32 %v408, %v409
        %v411 = vrot.slane %v410, 1
        %v412 = vmax.f32 %v410, %v411
        %v413 = vsub.f32 %v406, %v412
        %v414 = vmul.f32 %v413, 1.442695
        %v415 = vpow.pop %v414
        %v416 = vrot.slane %v415, 4
        %v417 = vadd.f32 %v415, %v416
        %v418 = vrot.slane %v417, 2
        %v419 = vadd.f32 %v417, %v418
        %v420 = vrot.slane %v419, 1
        %v421 = vadd.f32 %v419, %v420
        %v422 = vrcp.pop %v421
        %v423 = vmul.f32 %v415, %v422
        %v424 = vmul.f32 %v283, %v423
        %v425 = vadd.f32 %v283, %v424
        %426 = vadd.xlane.f32.xlu0 %v425
        %v427 = vpop.xlane.xlu0 %426
        %v428 = vmul.f32 %v427, 0.03125
        %v429 = vsub.f32 %v425, %v428
        %v430 = vlaneseq
        %v431 = vand.u32 %v430, 127
        %vm432 = vcmp.lt.s32.totalorder %v431, 32
        %v433 = vsel %vm432, 1, 0
        %vm434 = vcmp.eq.s32.totalorder %v433, 1
        %v435 = vsel %vm434, %v429, 0.0
        %v436 = vmul.f32 %v435, %v435
        %437 = vadd.xlane.f32.xlu0 %v436
        %v438 = vpop.xlane.xlu0 %437
        %v439 = vmul.f32 %v438, 0.03125
        %v440 = vadd.f32 %v439, 1e-05
        %v441 = vrsqrt.pop %v440
        %v442 = vmul.f32 %v429, %v441
        %v443 = vld [vmem:[%s4] sm:$0x1]
        %v445 = vlaneseq
        %v446 = vshrl.u32 %v445, 7
        %v447 = vsub.s32 0, %v446
        %v448 = vrot.slane %v443, %v447
        %v450 = vmul.f32 %v442, %v448
        %v451 = vld [vmem:[%s5] sm:$0x1]
        %v453 = vlaneseq
        %v454 = vshrl.u32 %v453, 7
        %v455 = vsub.s32 0, %v454
        %v456 = vrot.slane %v451, %v455
        %v458 = vadd.f32 %v450, %v456
        %459 = vst [vmem:[%s281] sm:$0xff] %v458
        %s460 = sand.u32 %s163, 1
        %s461 = scalar_lea.sflag [#allocation4], %s460
        %s462 = sand.u32 %s163, 1
        %s463 = smul.addr %s462, 8
        %s464 = scalar_lea.vmem [#allocation7], %s463
        // Predicated region
        $region53: #{tpu_custom_call.1} parent=43 // pred_check
          %p465 = pneg %p173
        $region54: #{tpu_custom_call.1} parent=43 // pred_check_branch
          %467 = sbr.rel (%p465) target = $region56
        $region55: #{tpu_custom_call.1} parent=43 // pred_region
          %s469 = ssub.s32 128, 128
          %470 = vsyncadd %s461, %s469
          %s471 = smul.addr %s24, 128
          %s472 = scalar_lea.hbm %s6, %s471
          %s474 = sshll.u32 %s464, 4
          %s475 = int_to_ptr.vmem [resolvable:$true] %s474
          %477 = dma.vmem_to_hbm [thread:$0]  %s475, 128, %s472, %s461
        $region56: #{tpu_custom_call.1} parent=43 // pred_fallthru
          _
      $region44: #{tpu_custom_call.1} parent=5 // pred_fallthru
        _
      %p478 = scmp.le.s32.totalorder 2, %s19
      // Predicated region
      $region57: #{tpu_custom_call.1} parent=5 // pred_check
        %p479 = pneg %p478
      $region58: #{tpu_custom_call.1} parent=5 // pred_check_branch
        %481 = sbr.rel (%p479) target = $region60
      $region59: #{tpu_custom_call.1} parent=5 // pred_region
        %s482 = ssub.s32 %s19, 2
        // Predicated region
        $region61: #{tpu_custom_call.1} parent=59 // pred_check
          %p483 = pneg %p179
        $region62: #{tpu_custom_call.1} parent=59 // pred_check_branch
          %485 = sbr.rel (%p483) target = $region64
        $region63: #{tpu_custom_call.1} parent=59 // pred_region
          %s486 = sand.u32 %s164, 1
          %s487 = scalar_lea.sflag [#allocation4], %s486
          %s488 = sand.u32 %s164, 1
          %s489 = smul.addr %s488, 8
          %s490 = scalar_lea.vmem [#allocation7], %s489
          %491 = dma.done %s487, 128
        $region64: #{tpu_custom_call.1} parent=59 // pred_fallthru
          _
      $region60: #{tpu_custom_call.1} parent=5 // pred_fallthru
        _
    $region6: #{tpu_custom_call.1} parent=1 // loop_footer
      %s23 = sadd.s32 1, %s19
    $region7: #{tpu_custom_call.1} parent=1 // loop_footer_branch
      %18 = sbr.rel target = $region3
    $region8: #{tpu_custom_call.1} parent=1 // loop_exit
      _
    %492 = vsyncpa [#allocation3], 1
    %s493 = scalar_lea.sflag [#allocation3], 1
    %494 = vsyncpa %s493, 1
    %495 = vsyncpa [#allocation6], 1
    %496 = vsyncpa [#allocation4], 1
    %s497 = scalar_lea.sflag [#allocation4], 1
    %498 = vsyncpa %s497, 1

</llo_original>
